<compile_context>
chip_gen: v5e
topology: v5e:2x2
jax: 0.10.0
libtpu: 0.0.40
codegen_flags: <defaults>
</compile_context>

<pallas_src>
import functools
import math

import jax
import jax.numpy as jnp
from jax.experimental import pallas as pl
from jax.experimental.pallas import tpu as pltpu


def _round_up(x, m):
    return ((x + m - 1) // m) * m


def _mha_pool_kernel(x_ref, wf_ref, bf_ref, mT_ref, woT_ref, bo_ref, o_ref,
                     *, tb, seq, num_heads, hidden):
    """One batch tile: fused projections + per-head softmax pooling + out-proj."""
    x = x_ref[...]                                              # (TB*S, H)

    # One wide MXU pass: [ V-projection | head scores (K-proj folded in) | pad ].
    fused = jnp.dot(x, wf_ref[...],
                    preferred_element_type=jnp.float32) + bf_ref[...]
    v = fused[:, :hidden]                                       # (TB*S, H)  fp32
    scores = fused[:, hidden:hidden + num_heads]                # (TB*S, nh) fp32
    scores = scores.reshape(tb, seq, num_heads)

    # Unnormalized softmax over the sequence axis (normalization deferred).
    s_max = jnp.max(scores, axis=1, keepdims=True)
    p = jnp.exp(scores - s_max)                                 # (tb, S, nh)
    denom = jnp.sum(p, axis=1, keepdims=True)                   # (tb, 1, nh)

    # Expand per-head weights to the feature axis and reduce over S.
    # (K = nh head-expand kept on the MXU; switch to a VPU broadcast only if
    #  bundle dumps show the MXU extended slot binding.)
    p_full = jnp.dot(p.reshape(tb * seq, num_heads), mT_ref[...],
                     preferred_element_type=jnp.float32)        # (TB*S, H)
    ctx = jnp.sum((p_full * v).reshape(tb, seq, hidden), axis=1)  # (tb, H)

    # Deferred normalization: per-head reciprocal applied to the small ctx.
    # pl.reciprocal stays on the otherwise idle EUP slot; approx=True is a
    # further free option (kept exact so the fp32 self-test stays tight).
    inv = pl.reciprocal(denom.reshape(tb, num_heads), approx=False)   # (tb, nh)
    inv_full = jnp.dot(inv, mT_ref[...],
                       preferred_element_type=jnp.float32)            # (tb, H)
    ctx = ctx * inv_full

    # Fused output projection; Wo^T / bo are zero-padded so the HBM output slab
    # last dim is a multiple of 128 (unmasked, lane-dense vst).
    out = jnp.dot(ctx.astype(woT_ref.dtype), woT_ref[...],
                  preferred_element_type=jnp.float32) + bo_ref[...]
    o_ref[...] = out.astype(o_ref.dtype)


def _tpu_hw_params():
    """(vmem_capacity_bytes, tensorcores_per_chip) with conservative fallbacks."""
    vmem_cap = 64 * 1024 * 1024          # v7x per-TC value: safe lower bound
    cores = None
    try:
        info = pltpu.get_tpu_info()
        v = getattr(info, "vmem_capacity_bytes", None)
        if v:
            vmem_cap = int(v)
        for name in ("num_cores", "num_tensorcores", "tensorcore_count"):
            c = getattr(info, name, None)
            if c:
                cores = int(c)
                break
    except Exception:
        pass
    if cores is None:
        # v7x (64 MiB VMEM per TC) has 2 TensorCores per chip; v5e/v6e have 1.
        cores = 2 if vmem_cap <= 64 * 1024 * 1024 else 1
    return vmem_cap, max(1, min(int(cores), 2))


def _choose_batch_tile(batch, seq, hidden, *, fused_cols, out_cols, num_heads,
                       compute_itemsize, target_rows, vmem_budget, min_steps=1):
    """Largest-enough divisor of batch that keeps (8,128) layout and VMEM happy."""
    def layout_ok(tb):
        # out block (TB, out_cols): TB must be the full batch or a multiple of 8.
        return tb == batch or tb % 8 == 0

    def vmem_bytes(tb):
        rows = tb * seq
        cd = compute_itemsize
        # streamed blocks (double-buffered by the pipeline)
        stream = 2 * rows * hidden * cd + 2 * tb * out_cols * 4
        # constant-index resident weights/biases (default double-buffered;
        # Buffered(1) would halve this)
        const = 2 * (hidden * fused_cols * cd + hidden * out_cols * cd
                     + fused_cols * 4 + out_cols * 4 + num_heads * hidden * 4)
        # fp32 live intermediates: fused result, v-slice, p_full/product,
        # scores/p, ctx/out
        inter = 4 * (rows * fused_cols
                     + 2 * rows * hidden
                     + 2 * rows * num_heads
                     + 2 * tb * out_cols)
        return stream + const + inter

    cands = [d for d in range(1, batch + 1)
             if batch % d == 0 and layout_ok(d) and vmem_bytes(d) <= vmem_budget]
    if not cands:
        cands = [d for d in range(1, batch + 1) if batch % d == 0 and layout_ok(d)]
    if min_steps > 1:
        # On 2-TC parts prefer a grid with >= min_steps steps (when layout-feasible)
        # so the "parallel" batch axis can be sharded across cores.
        multi = [d for d in cands if batch // d >= min_steps]
        if multi:
            cands = multi
    for d in cands:                       # smallest tile that fills the MXU rows
        if d * seq >= target_rows:
            return d
    return cands[-1]                      # otherwise the largest feasible tile


def mha_pooling(x, query, wq, wk, wv, wo, bq, bk, bv, bo, *,
                num_heads, compute_dtype=jnp.bfloat16, batch_tile=None):
    """x: (B, S, H); query (1, H); weights (H, H) PyTorch-style; biases (1, H) -> (B, H)."""
    B, S, H = x.shape
    assert H % num_heads == 0
    head_dim = H // num_heads
    nh = num_heads
    f32 = jnp.float32
    hi = jax.lax.Precision.HIGHEST        # tiny precomputes -> keep them exact

    # ---- batch-invariant precompute (hoisted out of the kernel) -------------
    qp = jnp.dot(query.astype(f32), wq.T.astype(f32), precision=hi) + bq    # (1, H)
    d_idx = jnp.arange(H, dtype=jnp.int32)
    h_idx = jnp.arange(nh, dtype=jnp.int32)
    m_mat = (d_idx[:, None] // head_dim == h_idx[None, :]).astype(f32)      # (H, nh)
    scale = 1.0 / math.sqrt(head_dim)
    qm = qp.reshape(H, 1) * m_mat * scale                                   # (H, nh)
    mT = m_mat.T                                                            # (nh, H)

    # K-projection fused into the score matmul (exact algebra).
    wk_score = jnp.dot(wk.T.astype(f32), qm, precision=hi)                  # (H, nh)
    b_score = jnp.dot(bk.reshape(1, H).astype(f32), qm, precision=hi)       # (1, nh)

    # One wide fused weight: [ Wv^T | Wk_score | 0 ], width padded to 128 lanes.
    w_total = _round_up(H + nh, 128)
    pad = w_total - (H + nh)
    wf = jnp.concatenate(
        [wv.T.astype(f32), wk_score, jnp.zeros((H, pad), f32)], axis=1
    ).astype(compute_dtype)                                                 # (H, Wt)
    bf = jnp.concatenate(
        [bv.reshape(1, H).astype(f32), b_score, jnp.zeros((1, pad), f32)], axis=1)

    # Output projection fused into the kernel; columns padded to 128 lanes so
    # the kernel writes a lane-dense slab (sliced back to H afterwards).
    h_pad = _round_up(H, 128)
    woT = jnp.concatenate(
        [wo.T.astype(f32), jnp.zeros((H, h_pad - H), f32)], axis=1
    ).astype(compute_dtype)                                                 # (H, Hp)
    bo2 = jnp.concatenate(
        [bo.reshape(1, H).astype(f32), jnp.zeros((1, h_pad - H), f32)], axis=1)

    x2d = x.reshape(B * S, H).astype(compute_dtype)

    # ---- per-generation VMEM / tile sizing -----------------------------------
    vmem_cap, ncores = _tpu_hw_params()
    # ~48 MiB on v7x (64 MiB/TC), ~96 MiB on v5e/v6e (128 MiB).
    vmem_limit = int(min(vmem_cap * 3 // 4, 112 * 1024 * 1024))
    target_rows = 512 if vmem_cap >= 96 * 1024 * 1024 else 256
    itemsize = jnp.dtype(compute_dtype).itemsize

    TB = batch_tile if batch_tile is not None else _choose_batch_tile(
        B, S, H, fused_cols=w_total, out_cols=h_pad, num_heads=nh,
        compute_itemsize=itemsize, target_rows=target_rows,
        vmem_budget=int(vmem_limit * 0.85), min_steps=ncores)

    # Validate TB (manual or auto) against the (8,128) sublane rule.
    if B % TB != 0 or not (TB == B or TB % 8 == 0):
        raise ValueError(
            f"batch_tile={TB} must divide batch={B} and be either the full "
            f"batch or a multiple of 8 (TPU sublane rule).")
    grid = (B // TB,)

    const = lambda shape: pl.BlockSpec(shape, lambda i: (0, 0))
    kernel = functools.partial(_mha_pool_kernel, tb=TB, seq=S,
                               num_heads=nh, hidden=H)

    out_padded = pl.pallas_call(
        kernel,
        out_shape=jax.ShapeDtypeStruct((B, h_pad), jnp.float32),
        grid=grid,
        in_specs=[
            pl.BlockSpec((TB * S, H), lambda i: (i, 0)),   # x rows for this tile
            const((H, w_total)),                           # [Wv^T | Wk^T@qm | 0]
            const((1, w_total)),                           # [bv   | bk@qm   | 0]
            const((nh, H)),                                # M^T head -> feature
            const((H, h_pad)),                             # Wo^T (0-padded cols)
            const((1, h_pad)),                             # bo   (0-padded)
        ],
        out_specs=pl.BlockSpec((TB, h_pad), lambda i: (i, 0)),
        compiler_params=pltpu.CompilerParams(
            dimension_semantics=("parallel",),
            vmem_limit_bytes=vmem_limit),
    )(x2d, wf, bf, mT, woT, bo2)

    return out_padded if h_pad == H else out_padded[:, :H]


def mha_pooling_reference(x, query, wq, wk, wv, wo, bq, bk, bv, bo, *, num_heads):
    """Pure-JAX reference mirroring nn.MultiheadAttention(batch_first=True)."""
    B, S, H = x.shape
    hd = H // num_heads
    q = query @ wq.T + bq                        # (1, H)
    k = x @ wk.T + bk                            # (B, S, H)
    v = x @ wv.T + bv                            # (B, S, H)
    qh = q.reshape(num_heads, hd)
    kh = k.reshape(B, S, num_heads, hd)
    vh = v.reshape(B, S, num_heads, hd)
    scores = jnp.einsum('hd,bshd->bhs', qh, kh) / math.sqrt(hd)
    p = jax.nn.softmax(scores, axis=-1)
    ctx = jnp.einsum('bhs,bshd->bhd', p, vh).reshape(B, H)
    return ctx @ wo.T + bo


if __name__ == "__main__":
    # Small shapes consistent with the module's forward.
    B, S, H = 2, 8, 32
    NUM_HEADS = 8

    key = jax.random.PRNGKey(0)
    k_x, k_q, k_in, k_out = jax.random.split(key, 4)

    x = jax.random.normal(k_x, (B, S, H), dtype=jnp.float32)

    # Deterministic synthetic parameters (shapes from nn.MultiheadAttention).
    query = jax.random.normal(k_q, (1, H), dtype=jnp.float32)   # (1, 1, H) squeezed
    in_proj_w = jax.random.normal(k_in, (3 * H, H), dtype=jnp.float32) * (1.0 / math.sqrt(H))
    in_proj_b = jnp.zeros((3 * H,), dtype=jnp.float32)
    wq, wk, wv = in_proj_w[:H], in_proj_w[H:2 * H], in_proj_w[2 * H:]
    bq, bk, bv = (in_proj_b[:H].reshape(1, H),
                  in_proj_b[H:2 * H].reshape(1, H),
                  in_proj_b[2 * H:].reshape(1, H))
    wo = jax.random.normal(k_out, (H, H), dtype=jnp.float32) * (1.0 / math.sqrt(H))
    bo = jnp.zeros((1, H), dtype=jnp.float32)

    ref = mha_pooling_reference(x, query, wq, wk, wv, wo, bq, bk, bv, bo,
                                num_heads=NUM_HEADS)

    # Strict check with fp32 operands — this is the logic guard (head mask,
    # scale, K-fusion algebra, deferred normalization, output projection).
    out_f32 = mha_pooling(x, query, wq, wk, wv, wo, bq, bk, bv, bo,
                          num_heads=NUM_HEADS, compute_dtype=jnp.float32)
    out_f32 = jax.block_until_ready(out_f32)
    assert out_f32.shape == (B, H)
    assert jnp.allclose(out_f32, ref, atol=5e-4, rtol=5e-4), \
        f"fp32 max abs err {jnp.max(jnp.abs(out_f32 - ref))}"

    # bf16 fast path (halved HBM/VMEM traffic, bf16 MXU). Tolerance only has to
    # cover bf16 cast/accumulation noise; logic bugs are caught by the fp32 test.
    out_bf16 = mha_pooling(x, query, wq, wk, wv, wo, bq, bk, bv, bo,
                           num_heads=NUM_HEADS, compute_dtype=jnp.bfloat16)
    out_bf16 = jax.block_until_ready(out_bf16)
    assert jnp.allclose(out_bf16, ref, atol=1e-1, rtol=1e-1), \
        f"bf16 max abs err {jnp.max(jnp.abs(out_bf16 - ref))}"

    print("KERNEL_OK")
</pallas_src>

<mosaic_0001>
module attributes {stable_mosaic.version = 11 : i64} {
  func.func @_mha_pool_kernel(%arg0: i32, %arg1: memref<16x32xf32, #tpu.memory_space<vmem>>, %arg2: memref<32x128xf32, #tpu.memory_space<vmem>>, %arg3: memref<1x128xf32, #tpu.memory_space<vmem>>, %arg4: memref<8x32xf32, #tpu.memory_space<vmem>>, %arg5: memref<32x128xf32, #tpu.memory_space<vmem>>, %arg6: memref<1x128xf32, #tpu.memory_space<vmem>>, %arg7: memref<2x128xf32, #tpu.memory_space<vmem>>) attributes {dimension_semantics = [#tpu.dimension_semantics<parallel>], iteration_bounds = array<i64: 1>, scalar_prefetch = 0 : i64, scratch_operands = 0 : i64, tpu.core_type = #tpu.core_type<tc>, window_params = [{transform_indices = @transform_0, window_bounds = array<i64: 16, 32>}, {pipeline_mode = #tpu.pipeline_mode<synchronous>, transform_indices = @transform_1, window_bounds = array<i64: 32, 128>}, {pipeline_mode = #tpu.pipeline_mode<synchronous>, transform_indices = @transform_2, window_bounds = array<i64: 1, 128>}, {pipeline_mode = #tpu.pipeline_mode<synchronous>, transform_indices = @transform_3, window_bounds = array<i64: 8, 32>}, {pipeline_mode = #tpu.pipeline_mode<synchronous>, transform_indices = @transform_4, window_bounds = array<i64: 32, 128>}, {pipeline_mode = #tpu.pipeline_mode<synchronous>, transform_indices = @transform_5, window_bounds = array<i64: 1, 128>}, {transform_indices = @transform_6, window_bounds = array<i64: 2, 128>}]} {
    %c0 = arith.constant 0 : index
    %c0_0 = arith.constant 0 : index
    %0 = vector.load %arg1[%c0, %c0_0] : memref<16x32xf32, #tpu.memory_space<vmem>>, vector<16x32xf32>
    %c0_1 = arith.constant 0 : index
    %c0_2 = arith.constant 0 : index
    %1 = vector.load %arg2[%c0_1, %c0_2] : memref<32x128xf32, #tpu.memory_space<vmem>>, vector<32x128xf32>
    %cst = arith.constant dense<0.000000e+00> : vector<16x128xf32>
    %2 = tpu.matmul %0, %1, %cst {dimension_numbers = #tpu.dot_dimension_numbers<[1], [0], [0], [1], [0, 0, 1, 1], [], []>} : vector<16x32xf32>, vector<32x128xf32>, vector<16x128xf32> -> vector<16x128xf32>
    %c0_3 = arith.constant 0 : index
    %c0_4 = arith.constant 0 : index
    %3 = vector.load %arg3[%c0_3, %c0_4] : memref<1x128xf32, #tpu.memory_space<vmem>>, vector<1x128xf32>
    %4 = vector.broadcast %3 : vector<1x128xf32> to vector<16x128xf32>
    %5 = arith.addf %2, %4 : vector<16x128xf32>
    %6 = vector.extract_strided_slice %5 {offsets = [0, 0], sizes = [16, 32], strides = [1, 1]} : vector<16x128xf32> to vector<16x32xf32>
    %7 = vector.extract_strided_slice %5 {offsets = [0, 32], sizes = [16, 8], strides = [1, 1]} : vector<16x128xf32> to vector<16x8xf32>
    %8 = vector.shape_cast %7 : vector<16x8xf32> to vector<2x8x8xf32>
    %cst_5 = arith.constant dense<0xFF800000> : vector<2x8xf32>
    %9 = vector.multi_reduction <maximumf>, %8, %cst_5 [1] : vector<2x8x8xf32> to vector<2x8xf32>
    %10 = vector.shape_cast %9 : vector<2x8xf32> to vector<2x1x8xf32>
    %11 = vector.broadcast %10 : vector<2x1x8xf32> to vector<2x8x8xf32>
    %12 = arith.subf %8, %11 : vector<2x8x8xf32>
    %13 = math.exp %12 : vector<2x8x8xf32>
    %cst_6 = arith.constant dense<0.000000e+00> : vector<2x8xf32>
    %14 = vector.multi_reduction <add>, %13, %cst_6 [1] : vector<2x8x8xf32> to vector<2x8xf32>
    %15 = vector.shape_cast %14 : vector<2x8xf32> to vector<2x1x8xf32>
    %16 = vector.shape_cast %13 : vector<2x8x8xf32> to vector<16x8xf32>
    %c0_7 = arith.constant 0 : index
    %c0_8 = arith.constant 0 : index
    %17 = vector.load %arg4[%c0_7, %c0_8] : memref<8x32xf32, #tpu.memory_space<vmem>>, vector<8x32xf32>
    %cst_9 = arith.constant dense<0.000000e+00> : vector<16x32xf32>
    %18 = tpu.matmul %16, %17, %cst_9 {dimension_numbers = #tpu.dot_dimension_numbers<[1], [0], [0], [1], [0, 0, 1, 1], [], []>} : vector<16x8xf32>, vector<8x32xf32>, vector<16x32xf32> -> vector<16x32xf32>
    %19 = arith.mulf %18, %6 : vector<16x32xf32>
    %20 = vector.shape_cast %19 : vector<16x32xf32> to vector<2x8x32xf32>
    %cst_10 = arith.constant dense<0.000000e+00> : vector<2x32xf32>
    %21 = vector.multi_reduction <add>, %20, %cst_10 [1] : vector<2x8x32xf32> to vector<2x32xf32>
    %22 = vector.shape_cast %15 : vector<2x1x8xf32> to vector<2x8xf32>
    %23 = tpu.reciprocal %22 : vector<2x8xf32> -> vector<2x8xf32>
    %c0_11 = arith.constant 0 : index
    %c0_12 = arith.constant 0 : index
    %24 = vector.load %arg4[%c0_11, %c0_12] : memref<8x32xf32, #tpu.memory_space<vmem>>, vector<8x32xf32>
    %cst_13 = arith.constant dense<0.000000e+00> : vector<2x32xf32>
    %25 = tpu.matmul %23, %24, %cst_13 {dimension_numbers = #tpu.dot_dimension_numbers<[1], [0], [0], [1], [0, 0, 1, 1], [], []>} : vector<2x8xf32>, vector<8x32xf32>, vector<2x32xf32> -> vector<2x32xf32>
    %26 = arith.mulf %21, %25 : vector<2x32xf32>
    %c0_14 = arith.constant 0 : index
    %c0_15 = arith.constant 0 : index
    %27 = vector.load %arg5[%c0_14, %c0_15] : memref<32x128xf32, #tpu.memory_space<vmem>>, vector<32x128xf32>
    %cst_16 = arith.constant dense<0.000000e+00> : vector<2x128xf32>
    %28 = tpu.matmul %26, %27, %cst_16 {dimension_numbers = #tpu.dot_dimension_numbers<[1], [0], [0], [1], [0, 0, 1, 1], [], []>} : vector<2x32xf32>, vector<32x128xf32>, vector<2x128xf32> -> vector<2x128xf32>
    %c0_17 = arith.constant 0 : index
    %c0_18 = arith.constant 0 : index
    %29 = vector.load %arg6[%c0_17, %c0_18] : memref<1x128xf32, #tpu.memory_space<vmem>>, vector<1x128xf32>
    %30 = vector.broadcast %29 : vector<1x128xf32> to vector<2x128xf32>
    %31 = arith.addf %28, %30 : vector<2x128xf32>
    %c0_19 = arith.constant 0 : index
    %c0_20 = arith.constant 0 : index
    %32 = vector.load %arg7[%c0_19, %c0_20] : memref<2x128xf32, #tpu.memory_space<vmem>>, vector<2x128xf32>
    tpu.vector_store %arg7[%c0_19, %c0_20], %31 {strides = array<i32>} : memref<2x128xf32, #tpu.memory_space<vmem>>, vector<2x128xf32>,
    return
  }
  func.func @transform_0(%arg0: i32) -> (i32, i32) {
    %c0_i32 = arith.constant 0 : i32
    %c0_i32_0 = arith.constant 0 : i32
    return %arg0, %c0_i32 : i32, i32
  }
  func.func @transform_1(%arg0: i32) -> (i32, i32) {
    %c0_i32 = arith.constant 0 : i32
    %c0_i32_0 = arith.constant 0 : i32
    %c0_i32_1 = arith.constant 0 : i32
    return %c0_i32, %c0_i32_0 : i32, i32
  }
  func.func @transform_2(%arg0: i32) -> (i32, i32) {
    %c0_i32 = arith.constant 0 : i32
    %c0_i32_0 = arith.constant 0 : i32
    %c0_i32_1 = arith.constant 0 : i32
    return %c0_i32, %c0_i32_0 : i32, i32
  }
  func.func @transform_3(%arg0: i32) -> (i32, i32) {
    %c0_i32 = arith.constant 0 : i32
    %c0_i32_0 = arith.constant 0 : i32
    %c0_i32_1 = arith.constant 0 : i32
    return %c0_i32, %c0_i32_0 : i32, i32
  }
  func.func @transform_4(%arg0: i32) -> (i32, i32) {
    %c0_i32 = arith.constant 0 : i32
    %c0_i32_0 = arith.constant 0 : i32
    %c0_i32_1 = arith.constant 0 : i32
    return %c0_i32, %c0_i32_0 : i32, i32
  }
  func.func @transform_5(%arg0: i32) -> (i32, i32) {
    %c0_i32 = arith.constant 0 : i32
    %c0_i32_0 = arith.constant 0 : i32
    %c0_i32_1 = arith.constant 0 : i32
    return %c0_i32, %c0_i32_0 : i32, i32
  }
  func.func @transform_6(%arg0: i32) -> (i32, i32) {
    %c0_i32 = arith.constant 0 : i32
    %c0_i32_0 = arith.constant 0 : i32
    return %arg0, %c0_i32 : i32, i32
  }
}

</mosaic_0001>

<llo_original>
// kernel: tpu_custom_call.1
$region0: #{tpu_custom_call.1}
  #allocation0 [shape = 'u32[]', space=smem, size = 0x4, offset = 0x4, fixed_abs, tag = 'smem constant byte address 0x4 - core index']
  #allocation1 [shape = 'u32[72,128]{1,0:T(1,128)}', space=vmem, size = 0x9000, scoped, tag = 'internal scratch']
  %s0 = inlined_call_operand.hbm [shape: f32[16,32], index: 0, kind: input, shape index: {}]
  %s1 = inlined_call_operand.hbm [shape: f32[32,128], index: 1, kind: input, shape index: {}]
  %s2 = inlined_call_operand.vmem [shape: f32[1,128], index: 2, kind: input, shape index: {}]
  %s3 = inlined_call_operand.hbm [shape: f32[8,32], index: 3, kind: input, shape index: {}]
  %s4 = inlined_call_operand.hbm [shape: f32[32,128], index: 4, kind: input, shape index: {}]
  %s5 = inlined_call_operand.vmem [shape: f32[1,128], index: 5, kind: input, shape index: {}]
  %s6 = inlined_call_operand.hbm [shape: f32[2,128], index: 6, kind: output, shape index: {}]
  %s7 = sld [smem:[#allocation0]]
  $region50: #{tpu_custom_call.1} parent=0
    _
  %s9 = ssub.s32 1, %s7
  %s10 = scalar_select 0, %s9, %s7
  $region1: #{tpu_custom_call.1} parent=0
    #allocation2 [shape = 'u8[8192]{0}', space=vmem, size = 0x2000, scoped, tag = 'input window, operand 0, single buffered']
    #allocation3 [shape = 's32[1]{0}', space=sflag, size = 0x4, scoped, tag = 'scoped memory for tpu_custom_call.1']
    #allocation4 [shape = 's32[1]{0}', space=sflag, size = 0x4, scoped, tag = 'scoped memory for tpu_custom_call.1']
    #allocation5 [shape = 'u8[16384]{0}', space=vmem, size = 0x4000, scoped, tag = 'input window, operand 1, single buffered']
    #allocation6 [shape = 's32[1]{0}', space=sflag, size = 0x4, scoped, tag = 'scoped memory for tpu_custom_call.1']
    #allocation7 [shape = 'u8[4096]{0}', space=vmem, size = 0x1000, scoped, tag = 'input window, operand 3, single buffered']
    #allocation8 [shape = 'u8[16384]{0}', space=vmem, size = 0x4000, scoped, tag = 'input window, operand 4, single buffered']
    #allocation9 [shape = 's32[1]{0}', space=sflag, size = 0x4, scoped, tag = 'scoped memory for tpu_custom_call.1']
    #allocation10 [shape = 'u8[1024]{0}', space=vmem, size = 0x400, scoped, tag = 'output window, operand 0, single buffered']
    %11 = vsyncpa [#allocation3], 0
    %12 = vsyncpa [#allocation6], 0
    %13 = vsyncpa [#allocation9], 0
    %14 = vsyncpa [#allocation4], 0
    // Predicated region
    $region2: #{tpu_custom_call.1} parent=1 // pred_check
      _
    $region3: #{tpu_custom_call.1} parent=1 // pred_check_branch
      %16 = sbr.rel (0) target = $region5
    $region4: #{tpu_custom_call.1} parent=1 // pred_region
      %18 = vsyncadd [#allocation3], 0
      %s19 = sshll.u32 %s0, 4
      %s20 = int_to_ptr.hbm [resolvable:$true] %s19
      %s21 = sshll.u32 [#allocation2], 4
      %s22 = int_to_ptr.vmem [resolvable:$true] %s21
      %27 = dma.hbm_to_vmem [thread:$0]  %s20, 256, %s22, [#allocation3], 128, 128, 8
    $region5: #{tpu_custom_call.1} parent=1 // pred_fallthru
      _
    // Predicated region
    $region6: #{tpu_custom_call.1} parent=1 // pred_check
      _
    $region7: #{tpu_custom_call.1} parent=1 // pred_check_branch
      %29 = sbr.rel (0) target = $region9
    $region8: #{tpu_custom_call.1} parent=1 // pred_region
      %31 = vsyncadd [#allocation6], 0
      %s32 = sshll.u32 %s1, 4
      %s33 = int_to_ptr.hbm [resolvable:$true] %s32
      %s34 = sshll.u32 [#allocation5], 4
      %s35 = int_to_ptr.vmem [resolvable:$true] %s34
      %40 = dma.hbm_to_vmem [thread:$0]  %s33, 512, %s35, [#allocation6], 128, 128, 8
    $region9: #{tpu_custom_call.1} parent=1 // pred_fallthru
      _
    // Predicated region
    $region10: #{tpu_custom_call.1} parent=1 // pred_check
      _
    $region11: #{tpu_custom_call.1} parent=1 // pred_check_branch
      %42 = sbr.rel (0) target = $region13
    $region12: #{tpu_custom_call.1} parent=1 // pred_region
      _
    $region13: #{tpu_custom_call.1} parent=1 // pred_fallthru
      _
    // Predicated region
    $region14: #{tpu_custom_call.1} parent=1 // pred_check
      _
    $region15: #{tpu_custom_call.1} parent=1 // pred_check_branch
      %44 = sbr.rel (0) target = $region17
    $region16: #{tpu_custom_call.1} parent=1 // pred_region
      %46 = vsyncadd [#allocation6], 0
      %s48 = sshll.u32 %s3, 4
      %s49 = int_to_ptr.hbm [resolvable:$true] %s48
      %s50 = sshll.u32 [#allocation7], 4
      %s51 = int_to_ptr.vmem [resolvable:$true] %s50
      %53 = dma.hbm_to_vmem [thread:$0]  %s49, 128, %s51, [#allocation6]
    $region17: #{tpu_custom_call.1} parent=1 // pred_fallthru
      _
    // Predicated region
    $region18: #{tpu_custom_call.1} parent=1 // pred_check
      _
    $region19: #{tpu_custom_call.1} parent=1 // pred_check_branch
      %55 = sbr.rel (0) target = $region21
    $region20: #{tpu_custom_call.1} parent=1 // pred_region
      %57 = vsyncadd [#allocation9], 0
      %s58 = sshll.u32 %s4, 4
      %s59 = int_to_ptr.hbm [resolvable:$true] %s58
      %s60 = sshll.u32 [#allocation8], 4
      %s61 = int_to_ptr.vmem [resolvable:$true] %s60
      %66 = dma.hbm_to_vmem [thread:$0]  %s59, 512, %s61, [#allocation9], 128, 128, 8
    $region21: #{tpu_custom_call.1} parent=1 // pred_fallthru
      _
    // Predicated region
    $region22: #{tpu_custom_call.1} parent=1 // pred_check
      _
    $region23: #{tpu_custom_call.1} parent=1 // pred_check_branch
      %68 = sbr.rel (0) target = $region25
    $region24: #{tpu_custom_call.1} parent=1 // pred_region
      _
    $region25: #{tpu_custom_call.1} parent=1 // pred_fallthru
      _
    // Predicated region
    $region26: #{tpu_custom_call.1} parent=1 // pred_check
      _
    $region27: #{tpu_custom_call.1} parent=1 // pred_check_branch
      %70 = sbr.rel (0) target = $region29
    $region28: #{tpu_custom_call.1} parent=1 // pred_region
      %72 = dma.done [#allocation3], 256
    $region29: #{tpu_custom_call.1} parent=1 // pred_fallthru
      _
    // Predicated region
    $region30: #{tpu_custom_call.1} parent=1 // pred_check
      _
    $region31: #{tpu_custom_call.1} parent=1 // pred_check_branch
      %74 = sbr.rel (0) target = $region33
    $region32: #{tpu_custom_call.1} parent=1 // pred_region
      %76 = dma.done [#allocation6], 512
    $region33: #{tpu_custom_call.1} parent=1 // pred_fallthru
      _
    // Predicated region
    $region34: #{tpu_custom_call.1} parent=1 // pred_check
      _
    $region35: #{tpu_custom_call.1} parent=1 // pred_check_branch
      %78 = sbr.rel (0) target = $region37
    $region36: #{tpu_custom_call.1} parent=1 // pred_region
      %80 = dma.done [#allocation6], 128
    $region37: #{tpu_custom_call.1} parent=1 // pred_fallthru
      _
    // Predicated region
    $region38: #{tpu_custom_call.1} parent=1 // pred_check
      _
    $region39: #{tpu_custom_call.1} parent=1 // pred_check_branch
      %82 = sbr.rel (0) target = $region41
    $region40: #{tpu_custom_call.1} parent=1 // pred_region
      %84 = dma.done [#allocation9], 512
    $region41: #{tpu_custom_call.1} parent=1 // pred_fallthru
      _
    %v85 = vld [vmem:[#allocation2] sm:$0xff]
    %v86 = vld [vmem:[#allocation2 + $0x8] sm:$0xff]
    %v87 = vld [vmem:[#allocation5] sm:$0xff]
    %v88 = vld [vmem:[#allocation5 + $0x8] sm:$0xff]
    %v89 = vld [vmem:[#allocation5 + $0x10] sm:$0xff]
    %v90 = vld [vmem:[#allocation5 + $0x18] sm:$0xff]
    %v91 = vld [vmem:[%s2] sm:$0x1]
    %v93 = vperm.slane %v91, 0
    %vm95 = vcmask 261120
    %v97 = vsel %vm95, %v85, 0
    %v100 = vsel %vm95, %v86, 0
    %102 = vmatpush.msra.mxu0 0.0
    %103 = vmatpush.msra.mxu0 0.0
    %104 = vmatpush.msra.mxu0 0.0
    %105 = vmatpush.msra.mxu0 0.0
    %106 = vmatpush.msra.mxu0 0.0
    %107 = vmatpush.msra.mxu0 0.0
    %108 = vmatpush.msra.mxu0 0.0
    %109 = vmatpush.msra.mxu0 0.0
    %110 = vmatpush.msra.mxu0 0.0
    %111 = vmatpush.msra.mxu0 0.0
    %112 = vmatpush.msra.mxu0 0.0
    %113 = vmatpush.msra.mxu0 0.0
    %114 = vmatpush.msra.mxu0 %v90
    %115 = vmatpush.msra.mxu0 %v89
    %116 = vmatpush.msra.mxu0 %v88
    %117 = vmatpush.msra.mxu0 %v87
    %118 = vmatmul.f32.gmra.mxu0 %v97
    %v119 = vpop.f32.mrf.mxu0
    %v120 = vadd.f32 %v93, %v119
    %121 = vmatmul.f32.gmra.mxu0 %v100
    %v122 = vpop.f32.mrf.mxu0
    %v123 = vadd.f32 %v93, %v122
    %124 = vdwg.mxu0
    %vm125 = vcmask 326912
    %v126 = vsel %vm125, %v120, -inf
    %v127 = vrot.slane %v126, 4
    %v128 = vmax.f32 %v126, %v127
    %v129 = vrot.slane %v128, 2
    %v130 = vmax.f32 %v128, %v129
    %v131 = vrot.slane %v130, 1
    %v132 = vmax.f32 %v130, %v131
    %v133 = vsel %vm125, %v123, -inf
    %v134 = vrot.slane %v133, 4
    %v135 = vmax.f32 %v133, %v134
    %v136 = vrot.slane %v135, 2
    %v137 = vmax.f32 %v135, %v136
    %v138 = vrot.slane %v137, 1
    %v139 = vmax.f32 %v137, %v138
    %v140 = vsub.f32 %v120, %v132
    %v141 = vsub.f32 %v123, %v139
    %v142 = vmul.f32 %v140, 1.442695
    %v143 = vpow.pop %v142
    %v144 = vmul.f32 %v141, 1.442695
    %v145 = vpow.pop %v144
    %v146 = vsel %vm125, %v143, 0.0
    %v147 = vrot.slane %v146, 4
    %v148 = vadd.f32 %v146, %v147
    %v149 = vrot.slane %v148, 2
    %v150 = vadd.f32 %v148, %v149
    %v151 = vrot.slane %v150, 1
    %v152 = vadd.f32 %v150, %v151
    %v153 = vsel %vm125, %v145, 0.0
    %v154 = vrot.slane %v153, 4
    %v155 = vadd.f32 %v153, %v154
    %v156 = vrot.slane %v155, 2
    %v157 = vadd.f32 %v155, %v156
    %v158 = vrot.slane %v157, 1
    %v159 = vadd.f32 %v157, %v158
    %v160 = vld [vmem:[#allocation7] sm:$0xff]
    %163 = vrot.lane.b32.xlu0 %v143, 96
    %v164 = vpop.permute.xlu0 %163
    %165 = vrot.lane.b32.xlu0 %v145, 96
    %v166 = vpop.permute.xlu0 %165
    %vm167 = vcmask 64512
    %v168 = vsel %vm167, %v164, 0
    %v170 = vsel %vm167, %v166, 0
    %172 = vmatpush.msra.mxu0 0.0
    %173 = vmatpush.msra.mxu0 0.0
    %174 = vmatpush.msra.mxu0 0.0
    %175 = vmatpush.msra.mxu0 0.0
    %176 = vmatpush.msra.mxu0 0.0
    %177 = vmatpush.msra.mxu0 0.0
    %178 = vmatpush.msra.mxu0 0.0
    %179 = vmatpush.msra.mxu0 0.0
    %180 = vmatpush.msra.mxu0 0.0
    %181 = vmatpush.msra.mxu0 0.0
    %182 = vmatpush.msra.mxu0 0.0
    %183 = vmatpush.msra.mxu0 0.0
    %184 = vmatpush.msra.mxu0 0.0
    %185 = vmatpush.msra.mxu0 0.0
    %186 = vmatpush.msra.mxu0 0.0
    %187 = vmatpush.msra.mxu0 %v160
    %188 = vmatmul.f32.gmra.mxu0 %v168
    %v189 = vpop.f32.mrf.mxu0
    %v190 = vadd.f32 0.0, %v189
    %191 = vmatmul.f32.gmra.mxu0 %v170
    %v192 = vpop.f32.mrf.mxu0
    %v193 = vadd.f32 0.0, %v192
    %194 = vdwg.mxu0
    %v195 = vmul.f32 %v190, %v120
    %v196 = vmul.f32 %v193, %v123
    %v197 = vsel %vm95, %v195, 0.0
    %v198 = vrot.slane %v197, 4
    %v199 = vadd.f32 %v197, %v198
    %v200 = vrot.slane %v199, 2
    %v201 = vadd.f32 %v199, %v200
    %v202 = vrot.slane %v201, 1
    %v203 = vadd.f32 %v201, %v202
    %v204 = vsel %vm95, %v196, 0.0
    %v205 = vrot.slane %v204, 4
    %v206 = vadd.f32 %v204, %v205
    %v207 = vrot.slane %v206, 2
    %v208 = vadd.f32 %v206, %v207
    %v209 = vrot.slane %v208, 1
    %v210 = vadd.f32 %v208, %v209
    %v211 = vrcp.pop %v152
    %v212 = vmul.f32 %v152, %v211
    %v213 = vsub.f32 1.0, %v212
    %v214 = vmul.f32 %v211, %v213
    %v215 = vadd.f32 %v211, %v214
    %vm216 = vweird.f32 %v152
    %vm217 = vweird.f32 %v211
    %vm218 = vmor %vm216, %vm217
    %v219 = vsel %vm218, %v211, %v215
    %v220 = vand.u32 2147483647, %v152
    %vm221 = vcmp.eq.f32.partialorder %v220, 8.507059e+37
    %v222 = vand.u32 %v152, 2147483648
    %v223 = vor.u32 1.1754944e-38, %v222
    %v224 = vsel %vm221, %v223, %v219
    %v225 = vrcp.pop %v159
    %v226 = vmul.f32 %v159, %v225
    %v227 = vsub.f32 1.0, %v226
    %v228 = vmul.f32 %v225, %v227
    %v229 = vadd.f32 %v225, %v228
    %vm230 = vweird.f32 %v159
    %vm231 = vweird.f32 %v225
    %vm232 = vmor %vm230, %vm231
    %v233 = vsel %vm232, %v225, %v229
    %v234 = vand.u32 2147483647, %v159
    %vm235 = vcmp.eq.f32.partialorder %v234, 8.507059e+37
    %v236 = vand.u32 %v159, 2147483648
    %v237 = vor.u32 1.1754944e-38, %v236
    %v238 = vsel %vm235, %v237, %v233
    %vm241 = vcmask 1041409
    %v242 = vsel %vm241, %v238, %v224
    %243 = vrot.lane.b32.xlu0 %v242, 96
    %v244 = vpop.permute.xlu0 %243
    %v245 = vsel %vm167, %v244, 0
    %247 = vmatpush.msra.mxu0 0.0
    %248 = vmatpush.msra.mxu0 0.0
    %249 = vmatpush.msra.mxu0 0.0
    %250 = vmatpush.msra.mxu0 0.0
    %251 = vmatpush.msra.mxu0 0.0
    %252 = vmatpush.msra.mxu0 0.0
    %253 = vmatpush.msra.mxu0 0.0
    %254 = vmatpush.msra.mxu0 0.0
    %255 = vmatpush.msra.mxu0 0.0
    %256 = vmatpush.msra.mxu0 0.0
    %257 = vmatpush.msra.mxu0 0.0
    %258 = vmatpush.msra.mxu0 0.0
    %259 = vmatpush.msra.mxu0 0.0
    %260 = vmatpush.msra.mxu0 0.0
    %261 = vmatpush.msra.mxu0 0.0
    %262 = vmatpush.msra.mxu0 %v160
    %263 = vmatmul.f32.gmra.mxu0 %v245
    %v264 = vpop.f32.mrf.mxu0
    %v265 = vadd.f32 0.0, %v264
    %266 = vdwg.mxu0
    %v268 = vrot.slane %v265, 1
    %v271 = vmul.f32 %v203, %v265
    %v272 = vmul.f32 %v210, %v268
    %v273 = vld [vmem:[#allocation8] sm:$0xff]
    %v274 = vld [vmem:[#allocation8 + $0x8] sm:$0xff]
    %v275 = vld [vmem:[#allocation8 + $0x10] sm:$0xff]
    %v276 = vld [vmem:[#allocation8 + $0x18] sm:$0xff]
    %v277 = vld [vmem:[%s5] sm:$0x1]
    %v279 = vperm.slane %v277, 0
    %v283 = vrot.slane %v272, 7
    %v284 = vsel %vm241, %v283, %v271
    %v285 = vsel %vm95, %v284, 0
    %287 = vmatpush.msra.mxu0 0.0
    %288 = vmatpush.msra.mxu0 0.0
    %289 = vmatpush.msra.mxu0 0.0
    %290 = vmatpush.msra.mxu0 0.0
    %291 = vmatpush.msra.mxu0 0.0
    %292 = vmatpush.msra.mxu0 0.0
    %293 = vmatpush.msra.mxu0 0.0
    %294 = vmatpush.msra.mxu0 0.0
    %295 = vmatpush.msra.mxu0 0.0
    %296 = vmatpush.msra.mxu0 0.0
    %297 = vmatpush.msra.mxu0 0.0
    %298 = vmatpush.msra.mxu0 0.0
    %299 = vmatpush.msra.mxu0 %v276
    %300 = vmatpush.msra.mxu0 %v275
    %301 = vmatpush.msra.mxu0 %v274
    %302 = vmatpush.msra.mxu0 %v273
    %303 = vmatmul.f32.gmra.mxu0 %v285
    %v304 = vpop.f32.mrf.mxu0
    %v305 = vadd.f32 %v279, %v304
    %306 = vdwg.mxu0
    %307 = vst [vmem:[#allocation10] sm:$0x3] %v305
    // Predicated region
    $region42: #{tpu_custom_call.1} parent=1 // pred_check
      _
    $region43: #{tpu_custom_call.1} parent=1 // pred_check_branch
      %309 = sbr.rel (0) target = $region45
    $region44: #{tpu_custom_call.1} parent=1 // pred_region
      %311 = vsyncadd [#allocation4], 0
      %s313 = sshll.u32 [#allocation10], 4
      %s314 = int_to_ptr.vmem [resolvable:$true] %s313
      %s315 = sshll.u32 %s6, 4
      %s316 = int_to_ptr.hbm [resolvable:$true] %s315
      %318 = dma.vmem_to_hbm [thread:$0]  %s314, 32, %s316, [#allocation4]
    $region45: #{tpu_custom_call.1} parent=1 // pred_fallthru
      _
    // Predicated region
    $region46: #{tpu_custom_call.1} parent=1 // pred_check
      _
    $region47: #{tpu_custom_call.1} parent=1 // pred_check_branch
      %320 = sbr.rel (0) target = $region49
    $region48: #{tpu_custom_call.1} parent=1 // pred_region
      %322 = dma.done [#allocation4], 32
    $region49: #{tpu_custom_call.1} parent=1 // pred_fallthru
      _
    %323 = vsyncpa [#allocation3], 1
    %324 = vsyncpa [#allocation6], 1
    %325 = vsyncpa [#allocation9], 1
    %326 = vsyncpa [#allocation4], 1

</llo_original>
